<compile_context>
chip_gen: v7x
topology: tpu7x:2x2x1
jax: 0.10.0
libtpu: 0.0.40
codegen_flags: <defaults>
</compile_context>

<pallas_src>
import math
from functools import partial

import jax
import jax.numpy as jnp
from jax.experimental import pallas as pl
from jax.experimental.pallas import tpu as pltpu


def _build_pe(d_model: int, max_seq_len: int) -> jnp.ndarray:
    """Deterministic sinusoidal positional-encoding table, shape (max_seq_len, d_model)."""
    position = jnp.arange(max_seq_len, dtype=jnp.float32)[:, None]          # (L, 1)
    div_term = jnp.exp(
        jnp.arange(0, d_model, 2, dtype=jnp.float32) * -(math.log(10000.0) / d_model)
    )                                                                        # (d_model//2,)
    angles = position * div_term                                             # (L, d_model//2)
    pe = jnp.zeros((max_seq_len, d_model), dtype=jnp.float32)
    pe = pe.at[:, 0::2].set(jnp.sin(angles))
    pe = pe.at[:, 1::2].set(jnp.cos(angles))
    return pe


def _pos_enc_kernel(x_ref, pe_ref, o_ref, *, scale: float):
    # x_ref:  (row_tile, col_tile)  lane-dense tile of the flattened input
    # pe_ref: (1, col_tile)         positional-encoding slice, broadcast over rows
    # scale is a compile-time immediate (sqrt(d_model)).
    o_ref[...] = (x_ref[...] * scale + pe_ref[...]).astype(o_ref.dtype)


def _pick_row_tile(rows: int, max_rows: int) -> int:
    """Largest multiple of 8 that divides `rows` and is <= max_rows (or the full dim)."""
    if rows <= 8 or rows % 8 != 0:
        return rows                      # block == full array dim is always legal
    tile = min(rows, max_rows)
    tile -= tile % 8
    while rows % tile != 0:
        tile -= 8
    return tile


def _pick_col_tile(cols: int, max_cols: int) -> int:
    """Largest multiple of 128 that divides `cols` and is <= max_cols (or the full dim)."""
    if cols <= 128 or cols % 128 != 0:
        return cols                      # block == full array dim is always legal
    tile = min(cols, max_cols)
    tile -= tile % 128
    while cols % tile != 0:
        tile -= 128
    return tile


def positional_encoder(x: jnp.ndarray, pe_full: jnp.ndarray) -> jnp.ndarray:
    """x: (B, S, D); pe_full: (max_seq_len, D). Returns (B, S, D)."""
    B, S, D = x.shape
    max_seq_len = pe_full.shape[0]
    if S > max_seq_len:
        raise ValueError(f"seq_len {S} exceeds max_seq_len {max_seq_len}")

    n = S * D
    # Lane-dense 2-D views: last dim is S*D (multiple of 128 in typical configs,
    # otherwise the full-dim block rule still keeps the BlockSpec legal).
    x2 = x.reshape(B, n)
    pe2 = pe_full[:S, :].reshape(1, n).astype(jnp.float32)   # pe[:, :seq_len], broadcast over batch

    # Tile selection: keep each (row_tile, col_tile) f32 block around <= 2 MiB so
    # the double-buffered x / out streams (+ tiny pe stream) stay well inside the
    # default scoped-VMEM budget on every generation (v5e 16 MiB, v6e/v7x 32 MiB).
    row_tile = _pick_row_tile(B, 256)
    col_budget = max(128, (2 << 20) // (row_tile * 4))
    col_tile = _pick_col_tile(n, col_budget)

    # Column axis outermost: pe's block index depends only on the outer axis, so
    # its (1, col_tile) tile stays resident across all inner (row) iterations.
    grid = (n // col_tile, B // row_tile)

    out2 = pl.pallas_call(
        partial(_pos_enc_kernel, scale=float(math.sqrt(D))),
        out_shape=jax.ShapeDtypeStruct((B, n), x.dtype),
        grid=grid,
        in_specs=[
            pl.BlockSpec((row_tile, col_tile), lambda j, i: (i, j)),
            pl.BlockSpec((1, col_tile), lambda j, i: (0, j)),
        ],
        out_specs=pl.BlockSpec((row_tile, col_tile), lambda j, i: (i, j)),
        compiler_params=pltpu.CompilerParams(
            dimension_semantics=("parallel", "parallel"),
        ),
    )(x2, pe2)

    return out2.reshape(B, S, D)


if __name__ == "__main__":
    # Small shapes consistent with the module: batch=2, seq=8, d_model=32.
    B, S, D = 2, 8, 32
    MAX_SEQ_LEN = 160

    key = jax.random.PRNGKey(0)
    x = jax.random.normal(key, (B, S, D), dtype=jnp.float32)

    pe_full = _build_pe(D, MAX_SEQ_LEN)

    out = positional_encoder(x, pe_full)
    out = jax.block_until_ready(out)

    # Reference check in plain JAX (mirrors the PyTorch forward exactly).
    ref = x * math.sqrt(D) + pe_full[None, :S, :]
    assert out.shape == (B, S, D)
    assert jnp.allclose(out, ref, atol=1e-5, rtol=1e-5), "mismatch vs reference"

    print("KERNEL_OK")
</pallas_src>

<mosaic_0001>
module attributes {stable_mosaic.version = 11 : i64} {
  func.func @_pos_enc_kernel(%arg0: i32, %arg1: i32, %arg2: memref<2x256xf32, #tpu.memory_space<vmem>>, %arg3: memref<1x256xf32, #tpu.memory_space<vmem>>, %arg4: memref<2x256xf32, #tpu.memory_space<vmem>>) attributes {dimension_semantics = [#tpu.dimension_semantics<parallel>, #tpu.dimension_semantics<parallel>], iteration_bounds = array<i64: 1, 1>, scalar_prefetch = 0 : i64, scratch_operands = 0 : i64, tpu.core_type = #tpu.core_type<tc>, window_params = [{transform_indices = @transform_0, window_bounds = array<i64: 2, 256>}, {transform_indices = @transform_1, window_bounds = array<i64: 1, 256>}, {transform_indices = @transform_2, window_bounds = array<i64: 2, 256>}]} {
    %c0 = arith.constant 0 : index
    %c0_0 = arith.constant 0 : index
    %0 = vector.load %arg2[%c0, %c0_0] : memref<2x256xf32, #tpu.memory_space<vmem>>, vector<2x256xf32>
    %cst = arith.constant 5.65685415 : f32
    %1 = vector.broadcast %cst : f32 to vector<2x256xf32>
    %2 = arith.mulf %0, %1 : vector<2x256xf32>
    %c0_1 = arith.constant 0 : index
    %c0_2 = arith.constant 0 : index
    %3 = vector.load %arg3[%c0_1, %c0_2] : memref<1x256xf32, #tpu.memory_space<vmem>>, vector<1x256xf32>
    %4 = vector.broadcast %3 : vector<1x256xf32> to vector<2x256xf32>
    %5 = arith.addf %2, %4 : vector<2x256xf32>
    %c0_3 = arith.constant 0 : index
    %c0_4 = arith.constant 0 : index
    %6 = vector.load %arg4[%c0_3, %c0_4] : memref<2x256xf32, #tpu.memory_space<vmem>>, vector<2x256xf32>
    tpu.vector_store %arg4[%c0_3, %c0_4], %5 {strides = array<i32>} : memref<2x256xf32, #tpu.memory_space<vmem>>, vector<2x256xf32>,
    return
  }
  func.func @transform_0(%arg0: i32, %arg1: i32) -> (i32, i32) {
    %c0_i32 = arith.constant 0 : i32
    return %arg1, %arg0 : i32, i32
  }
  func.func @transform_1(%arg0: i32, %arg1: i32) -> (i32, i32) {
    %c0_i32 = arith.constant 0 : i32
    %c0_i32_0 = arith.constant 0 : i32
    return %c0_i32, %arg0 : i32, i32
  }
  func.func @transform_2(%arg0: i32, %arg1: i32) -> (i32, i32) {
    %c0_i32 = arith.constant 0 : i32
    return %arg1, %arg0 : i32, i32
  }
}

</mosaic_0001>

<llo_original>
// kernel: tpu_custom_call.1
$region0: #{tpu_custom_call.1}
  #allocation0 [shape = 'u32[]', space=smem, size = 0x4, offset = 0x4, fixed_abs, tag = 'smem constant byte address 0x4 - core index']
  #allocation1 [shape = 'u32[144,128]{1,0:T(1,128)}', space=vmem, size = 0x12000, scoped, tag = 'internal scratch']
  %s0 = inlined_call_operand.hbm [shape: f32[2,256], index: 0, kind: input, shape index: {}]
  %s1 = inlined_call_operand.vmem [shape: f32[1,256], index: 1, kind: input, shape index: {}]
  %s2 = inlined_call_operand.hbm [shape: f32[2,256], index: 2, kind: output, shape index: {}]
  %s3 = sld [smem:[#allocation0]]
  $region22: #{tpu_custom_call.1} parent=0
    _
  %s5 = ssub.s32 1, %s3
  %s6 = scalar_select 0, %s5, %s3
  $region1: #{tpu_custom_call.1} parent=0
    #allocation2 [shape = 'u8[2048]{0}', space=vmem, size = 0x800, scoped, tag = 'input window, operand 0, single buffered']
    #allocation3 [shape = 's32[1]{0}', space=sflag, size = 0x4, scoped, tag = 'scoped memory for tpu_custom_call.1']
    #allocation4 [shape = 's32[1]{0}', space=sflag, size = 0x4, scoped, tag = 'scoped memory for tpu_custom_call.1']
    #allocation5 [shape = 'u8[2048]{0}', space=vmem, size = 0x800, scoped, tag = 'output window, operand 0, single buffered']
    %7 = vsyncpa [#allocation3], 0
    %8 = vsyncpa [#allocation4], 0
    // Predicated region
    $region2: #{tpu_custom_call.1} parent=1 // pred_check
      _
    $region3: #{tpu_custom_call.1} parent=1 // pred_check_branch
      %10 = sbr.rel (0) target = $region5
    $region4: #{tpu_custom_call.1} parent=1 // pred_region
      %s12 = ssub.s32 64, 64
      %13 = vsyncadd [#allocation3], %s12
      %s15 = sshll.u32 [#allocation2], 4
      %s16 = int_to_ptr.vmem [resolvable:$true] %s15
      %18 = dma.hbm_to_vmem [thread:$0]  %s0, 64, %s16, [#allocation3]
    $region5: #{tpu_custom_call.1} parent=1 // pred_fallthru
      _
    // Predicated region
    $region6: #{tpu_custom_call.1} parent=1 // pred_check
      _
    $region7: #{tpu_custom_call.1} parent=1 // pred_check_branch
      %20 = sbr.rel (0) target = $region9
    $region8: #{tpu_custom_call.1} parent=1 // pred_region
      _
    $region9: #{tpu_custom_call.1} parent=1 // pred_fallthru
      _
    // Predicated region
    $region10: #{tpu_custom_call.1} parent=1 // pred_check
      _
    $region11: #{tpu_custom_call.1} parent=1 // pred_check_branch
      %22 = sbr.rel (0) target = $region13
    $region12: #{tpu_custom_call.1} parent=1 // pred_region
      %23 = dma.done [#allocation3], 64
    $region13: #{tpu_custom_call.1} parent=1 // pred_fallthru
      _
    %v24 = vld [vmem:[#allocation2] sm:$0xf]
    %v25 = vmul.f32 %v24, 5.656854
    %v26 = vld [vmem:[%s1] sm:$0x3]
    %v28 = vlaneseq
    %v29 = vshrl.u32 %v28, 7
    %v30 = vsub.s32 0, %v29
    %v31 = vrot.slane %v26, %v30
    %v32 = vlaneseq
    %v33 = vshrl.u32 %v32, 7
    %v34 = vsub.s32 1, %v33
    %v35 = vrot.slane %v26, %v34
    %v36 = vcombine.low %v31, %v35
    %v38 = vunpack.c.l.s4 1983009808
    %v39 = vunpack.c.0.s8 %v38
    %v40 = vlaneseq
    %v41 = vshrl.u32 %v40, 7
    %v42 = vsub.s32 %v39, %v41
    %v43 = vrot.slane %v36, %v42
    %v45 = vadd.f32 %v25, %v43
    %46 = vst [vmem:[#allocation5] sm:$0xf] %v45
    // Predicated region
    $region14: #{tpu_custom_call.1} parent=1 // pred_check
      _
    $region15: #{tpu_custom_call.1} parent=1 // pred_check_branch
      %48 = sbr.rel (0) target = $region17
    $region16: #{tpu_custom_call.1} parent=1 // pred_region
      %s50 = ssub.s32 64, 64
      %51 = vsyncadd [#allocation4], %s50
      %s53 = sshll.u32 [#allocation5], 4
      %s54 = int_to_ptr.vmem [resolvable:$true] %s53
      %56 = dma.vmem_to_hbm [thread:$0]  %s54, 64, %s2, [#allocation4]
    $region17: #{tpu_custom_call.1} parent=1 // pred_fallthru
      _
    // Predicated region
    $region18: #{tpu_custom_call.1} parent=1 // pred_check
      _
    $region19: #{tpu_custom_call.1} parent=1 // pred_check_branch
      %58 = sbr.rel (0) target = $region21
    $region20: #{tpu_custom_call.1} parent=1 // pred_region
      %59 = dma.done [#allocation4], 64
    $region21: #{tpu_custom_call.1} parent=1 // pred_fallthru
      _
    %60 = vsyncpa [#allocation3], 1
    %61 = vsyncpa [#allocation4], 1

</llo_original>
